<compile_context>
chip_gen: v6e
topology: v6e:2x2x1
jax: 0.10.0
libtpu: 0.0.40
codegen_flags: <defaults>
</compile_context>

<pallas_src>
import jax
import jax.numpy as jnp
from jax import lax
from jax.experimental import pallas as pl
from jax.experimental.pallas import tpu as pltpu

HIDDEN = 20
INPUT_SIZE = 1
N_OUT = 10
_LANE = 128
_SUB = 8


def _round_up(n, m):
    return (n + m - 1) // m * m


def _deep_rnn_kernel(x_ref, wx_ref, bcat_ref, wbig_ref, wfc_ref, bfc_ref,
                     out_ref, buf_ref, carry_ref):
    """One (batch-tile, time-chunk) grid cell.

    x_ref     : (Tc, Bt)        pre-transposed inputs (input_size=1 squeezed)
    wx_ref    : (1, H2)         [W_ih_l0^T padded | 0]
    bcat_ref  : (1, H2)         [b_ih_l0+b_hh_l0  | b_ih_l1+b_hh_l1]
    wbig_ref  : (H2, H2)        [[W_hh_l0^T, W_ih_l1^T], [0, W_hh_l1^T]]
    wfc_ref   : (H2, n_out)     [0 ; fc_w^T]   (zero rows for the h1 half)
    bfc_ref   : (1, n_out)
    out_ref   : (Tc, Bt, n_out) per-chunk output block (wrapper swaps to (B, T, n_out))
    buf_ref   : VMEM (Tc, Bt, H2) fused scratch: row s holds inj[s] until the wavefront
                consumes it, then is overwritten in place with the hidden history.
    carry_ref : VMEM (Bt, H2)   persistent wavefront carry hcat = [h1[e] | h2[e-1]]
                across time chunks of the same batch tile.
    """
    Tc, Bt = x_ref.shape
    H2 = wbig_ref.shape[0]
    Hp = H2 // 2
    n_out = wfc_ref.shape[1]
    t_chunk = pl.program_id(1)

    wbig = wbig_ref[...]
    bcat_row = bcat_ref[...]                                  # (1, H2)

    # ---- per-chunk injection precompute (off the recurrence critical path) ----
    # buf[t, b, :Hp] = x[t, b] * W_ih_l0^T + (b_ih_l0 + b_hh_l0)
    # buf[t, b, Hp:] = (b_ih_l1 + b_hh_l1)
    # TODO(synk): if the MLIR shows per-element broadcasts here, switch to the MXU form
    #             reshape(x, (Tc*Bt, 1)) @ wx as suggested in the perf review.
    buf_ref[...] = (x_ref[...][:, :, None] * wx_ref[...][None, :, :]
                    + bcat_row[None, :, :])

    def wavestep(hcat, inj_s):
        pre = jnp.dot(hcat, wbig, preferred_element_type=jnp.float32)
        return jnp.tanh(pre + inj_s)                          # [h1[s] | h2[s-1]]

    lane = lax.broadcasted_iota(jnp.int32, (Bt, H2), 1)
    first_half = lane < Hp

    @pl.when(t_chunk == 0)
    def _():
        # prologue: h1[0] = tanh(inj[0][:, :Hp]);  h2[-1] = 0
        carry_ref[...] = jnp.where(first_half, jnp.tanh(buf_ref[0]), 0.0)

    @pl.when(t_chunk != 0)
    def _():
        # first wavefront step of a later chunk only advances the carry (its h2 half
        # recomputes the previous chunk's last row, which was already written there).
        carry_ref[...] = wavestep(carry_ref[...], buf_ref[0])

    def step(s, hcat):
        hnew = wavestep(hcat, buf_ref[s])
        buf_ref[s - 1] = hnew        # inj[s-1] is dead -> reuse its slot for history
        return hnew

    unroll = True if Tc <= 64 else 8
    hcat_last = lax.fori_loop(1, Tc, step, carry_ref[...], unroll=unroll)
    carry_ref[...] = hcat_last       # wavefront carry into the next time chunk

    # epilogue half-step: h2 of the chunk's last row from (h1[last], h2[last-1]).
    # Its h1 half is junk but is zeroed by wfc's zero rows below.
    buf_ref[Tc - 1] = wavestep(hcat_last, bcat_row)

    # ---- deferred Linear: one bulk matmul + one bulk store per chunk ----
    # wfc stays (H2, n_out) with zero rows for the non-h2 lanes: slicing the 32 h2
    # lanes out first would force a lane relayout that costs more than the halved K.
    h_all = buf_ref[...].reshape(Tc * Bt, H2)                 # layout-preserving reshape
    y = jnp.dot(h_all, wfc_ref[...], preferred_element_type=jnp.float32) + bfc_ref[...]
    out_ref[...] = y.reshape(Tc, Bt, n_out)


def _vmem_ceiling_bytes():
    cap = 128 * 1024 * 1024
    try:
        info = pltpu.get_tpu_info()
        for name in ("vmem_capacity_bytes", "vmem_size_bytes", "vmem_bytes"):
            v = getattr(info, name, None)
            if v:
                cap = int(v)
                break
    except Exception:
        pass
    # ~20% headroom under physical VMEM: ~102 MiB on v5e/v6e (128 MiB), ~51 MiB on v7x.
    return cap * 4 // 5


def _vmem_bytes_estimate(b_tile, tc, H2, n_out):
    f32 = 4
    ru = _round_up
    x_blk = ru(tc, _SUB) * ru(b_tile, _LANE) * f32
    out_blk = tc * ru(b_tile, _SUB) * ru(n_out, _LANE) * f32
    w_bytes = (2 * _SUB * ru(H2, _LANE)                    # wx, bcat
               + ru(H2, _SUB) * ru(H2, _LANE)              # wbig
               + ru(H2, _SUB) * ru(n_out, _LANE)           # wfc
               + _SUB * ru(n_out, _LANE)) * f32            # bfc
    buf = tc * ru(b_tile, _SUB) * ru(H2, _LANE) * f32      # fused inj/history scratch
    carry = ru(b_tile, _SUB) * ru(H2, _LANE) * f32
    y_tmp = tc * ru(b_tile, _SUB) * ru(n_out, _LANE) * f32  # FC result before store
    return 2 * (x_blk + out_blk + w_bytes) + buf + carry + y_tmp


def _choose_tiling(B, T, H2, n_out, t_chunk_max):
    ceiling = _vmem_ceiling_bytes()
    B_pad8 = _round_up(B, 8)

    # Batch tile: as much batch per serial step as the MXU flat-latency region allows.
    # At exactly 256 rows, split into 2x128 so both v7x TensorCores get a tile at no
    # per-step latency cost on any generation.
    if B_pad8 <= 256:
        B_tile = 128 if B_pad8 == 256 else B_pad8
    else:
        B_tile = 256

    # Time chunk: bounds scratch/output VMEM independent of T.
    if T <= t_chunk_max:
        Tc = T
    else:
        n_chunks = -(-T // t_chunk_max)
        Tc = _round_up(-(-T // n_chunks), 8)

    # Fit the per-generation VMEM ceiling: shrink the batch tile first (keeping it a
    # multiple of 128 lanes when the batch is split), then the time chunk.
    while B_tile > 128 and _vmem_bytes_estimate(B_tile, Tc, H2, n_out) > ceiling:
        B_tile -= 128
    while Tc > 8 and _vmem_bytes_estimate(B_tile, Tc, H2, n_out) > ceiling:
        Tc = max(8, _round_up(Tc // 2, 8))

    B_pad = _round_up(B_pad8, B_tile)
    T_pad = _round_up(T, Tc)
    est = _vmem_bytes_estimate(B_tile, Tc, H2, n_out)
    vmem_limit = int(min(max(est * 5 // 4, 32 * 1024 * 1024), ceiling))
    return B_tile, B_pad, Tc, T_pad, vmem_limit


def deep_rnn_c_forward(x, params, *, t_chunk_max=256):
    """x: (B, T, 1) float32 -> (B, T, n_out) float32."""
    B, T, in_sz = x.shape
    assert in_sz == INPUT_SIZE
    H = params["w_hh_l0"].shape[0]
    n_out = params["fc_w"].shape[0]
    Hp = max(32, _round_up(H, 8))            # pad hidden 20 -> 32
    H2 = 2 * Hp
    f32 = jnp.float32

    def pad2(a, r, c):
        a = a.astype(f32)
        return jnp.zeros((r, c), f32).at[: a.shape[0], : a.shape[1]].set(a)

    def pad1(a, n):
        a = a.astype(f32)
        return jnp.zeros((n,), f32).at[: a.shape[0]].set(a)

    # Fused block recurrent weight:  [[W_hh_l0^T, W_ih_l1^T], [0, W_hh_l1^T]]
    whh0_t = pad2(params["w_hh_l0"].T, Hp, Hp)
    wih1_t = pad2(params["w_ih_l1"].T, Hp, Hp)
    whh1_t = pad2(params["w_hh_l1"].T, Hp, Hp)
    wbig = jnp.concatenate(
        [jnp.concatenate([whh0_t, wih1_t], axis=1),
         jnp.concatenate([jnp.zeros((Hp, Hp), f32), whh1_t], axis=1)],
        axis=0)                                                        # (H2, H2)

    wih0_row = pad2(params["w_ih_l0"].T, 1, Hp)
    wx = jnp.concatenate([wih0_row, jnp.zeros((1, Hp), f32)], axis=1)  # (1, H2)

    b0 = pad1(params["b_ih_l0"] + params["b_hh_l0"], Hp)
    b1 = pad1(params["b_ih_l1"] + params["b_hh_l1"], Hp)
    bcat = jnp.concatenate([b0, b1])[None, :]                          # (1, H2)

    # zero rows for the h1/inj lanes keep the "junk first half" invariant harmless.
    wfc_big = jnp.zeros((H2, n_out), f32).at[Hp:Hp + H, :].set(params["fc_w"].T)
    bfc = params["fc_b"][None, :].astype(f32)                          # (1, n_out)

    B_tile, B_pad, Tc, T_pad, vmem_limit = _choose_tiling(B, T, H2, n_out, t_chunk_max)
    grid = (B_pad // B_tile, T_pad // Tc)

    # x pre-transposed to (T, B): batch sits on the lane axis inside the kernel and
    # the prologue no longer needs an XLU transpose (transpose is cheap XLA glue here).
    xT = jnp.swapaxes(x[..., 0].astype(f32), 0, 1)
    xT = jnp.pad(xT, ((0, T_pad - T), (0, B_pad - B)))

    out = pl.pallas_call(
        _deep_rnn_kernel,
        out_shape=jax.ShapeDtypeStruct((T_pad, B_pad, n_out), f32),
        grid_spec=pltpu.PrefetchScalarGridSpec(
            num_scalar_prefetch=0,
            grid=grid,
            in_specs=[
                pl.BlockSpec((Tc, B_tile), lambda i, t: (t, i)),       # x chunk
                pl.BlockSpec((1, H2), lambda i, t: (0, 0)),            # wx
                pl.BlockSpec((1, H2), lambda i, t: (0, 0)),            # bcat
                pl.BlockSpec((H2, H2), lambda i, t: (0, 0)),           # wbig
                pl.BlockSpec((H2, n_out), lambda i, t: (0, 0)),        # wfc
                pl.BlockSpec((1, n_out), lambda i, t: (0, 0)),         # bfc
            ],
            out_specs=pl.BlockSpec((Tc, B_tile, n_out), lambda i, t: (t, i, 0)),
            scratch_shapes=[
                pltpu.VMEM((Tc, B_tile, H2), f32),    # fused inj / hidden-history buffer
                pltpu.VMEM((B_tile, H2), f32),        # persistent wavefront carry
            ],
        ),
        compiler_params=pltpu.CompilerParams(
            dimension_semantics=("parallel", "arbitrary"),
            vmem_limit_bytes=vmem_limit,
        ),
    )(xT, wx, bcat, wbig, wfc_big, bfc)

    # (T_pad, B_pad, n_out) -> (B, T, n_out): transpose + un-pad as cheap XLA glue.
    return jnp.swapaxes(out, 0, 1)[:B, :T]


def init_params(key, hidden=HIDDEN, input_size=INPUT_SIZE, n_out=N_OUT):
    """Deterministic init mirroring PyTorch's U(-1/sqrt(H), 1/sqrt(H))."""
    k = 1.0 / jnp.sqrt(jnp.float32(hidden))
    names_shapes = [
        ("w_ih_l0", (hidden, input_size)),
        ("w_hh_l0", (hidden, hidden)),
        ("b_ih_l0", (hidden,)),
        ("b_hh_l0", (hidden,)),
        ("w_ih_l1", (hidden, hidden)),
        ("w_hh_l1", (hidden, hidden)),
        ("b_ih_l1", (hidden,)),
        ("b_hh_l1", (hidden,)),
        ("fc_w", (n_out, hidden)),
        ("fc_b", (n_out,)),
    ]
    keys = jax.random.split(key, len(names_shapes))
    return {
        name: jax.random.uniform(kk, shape, jnp.float32, -k, k)
        for kk, (name, shape) in zip(keys, names_shapes)
    }


def deep_rnn_c_ref(x, params):
    """Pure-JAX reference of the PyTorch forward (sanity check)."""
    B, T, _ = x.shape

    def step(carry, xt):
        h1, h2 = carry
        h1n = jnp.tanh(xt @ params["w_ih_l0"].T + params["b_ih_l0"]
                       + h1 @ params["w_hh_l0"].T + params["b_hh_l0"])
        h2n = jnp.tanh(h1n @ params["w_ih_l1"].T + params["b_ih_l1"]
                       + h2 @ params["w_hh_l1"].T + params["b_hh_l1"])
        return (h1n, h2n), h2n

    h0 = jnp.zeros((B, HIDDEN), jnp.float32)
    _, outs = lax.scan(step, (h0, h0), jnp.swapaxes(x, 0, 1))    # (T, B, H)
    rnn_out = jnp.swapaxes(outs, 0, 1)                           # (B, T, H)
    y = rnn_out.reshape(-1, HIDDEN) @ params["fc_w"].T + params["fc_b"]
    return y.reshape(B, T, -1)


if __name__ == "__main__":
    key = jax.random.PRNGKey(0)
    pkey, xkey, xkey2 = jax.random.split(key, 3)
    params = init_params(pkey)

    # Primary small check (single time chunk).
    B, T = 2, 8
    x = jax.random.normal(xkey, (B, T, INPUT_SIZE), jnp.float32)
    y = jax.block_until_ready(deep_rnn_c_forward(x, params))
    y_ref = deep_rnn_c_ref(x, params)
    assert y.shape == (B, T, N_OUT)
    assert jnp.allclose(y, y_ref, atol=5e-3, rtol=5e-3)

    # Secondary check exercising time chunking (3 chunks), time padding and batch padding.
    B2, T2 = 3, 21
    x2 = jax.random.normal(xkey2, (B2, T2, INPUT_SIZE), jnp.float32)
    y2 = jax.block_until_ready(deep_rnn_c_forward(x2, params, t_chunk_max=8))
    y2_ref = deep_rnn_c_ref(x2, params)
    assert y2.shape == (B2, T2, N_OUT)
    assert jnp.allclose(y2, y2_ref, atol=1e-2, rtol=1e-2)

    print("KERNEL_OK")
</pallas_src>

<mosaic_0001>
module attributes {stable_mosaic.version = 11 : i64} {
  func.func @_deep_rnn_kernel(%arg0: i32, %arg1: i32, %arg2: memref<8x8xf32, #tpu.memory_space<vmem>>, %arg3: memref<1x64xf32, #tpu.memory_space<vmem>>, %arg4: memref<1x64xf32, #tpu.memory_space<vmem>>, %arg5: memref<64x64xf32, #tpu.memory_space<vmem>>, %arg6: memref<64x10xf32, #tpu.memory_space<vmem>>, %arg7: memref<1x10xf32, #tpu.memory_space<vmem>>, %arg8: memref<8x8x10xf32, #tpu.memory_space<vmem>>, %arg9: memref<8x8x64xf32, #tpu.memory_space<vmem>>, %arg10: memref<8x64xf32, #tpu.memory_space<vmem>>) attributes {dimension_semantics = [#tpu.dimension_semantics<parallel>, #tpu.dimension_semantics<arbitrary>], iteration_bounds = array<i64: 1, 1>, scalar_prefetch = 0 : i64, scratch_operands = 2 : i64, tpu.core_type = #tpu.core_type<tc>, window_params = [{transform_indices = @transform_0, window_bounds = array<i64: 8, 8>}, {pipeline_mode = #tpu.pipeline_mode<synchronous>, transform_indices = @transform_1, window_bounds = array<i64: 1, 64>}, {pipeline_mode = #tpu.pipeline_mode<synchronous>, transform_indices = @transform_2, window_bounds = array<i64: 1, 64>}, {pipeline_mode = #tpu.pipeline_mode<synchronous>, transform_indices = @transform_3, window_bounds = array<i64: 64, 64>}, {pipeline_mode = #tpu.pipeline_mode<synchronous>, transform_indices = @transform_4, window_bounds = array<i64: 64, 10>}, {pipeline_mode = #tpu.pipeline_mode<synchronous>, transform_indices = @transform_5, window_bounds = array<i64: 1, 10>}, {transform_indices = @transform_6, window_bounds = array<i64: 8, 8, 10>}]} {
    %c0 = arith.constant 0 : index
    %c0_0 = arith.constant 0 : index
    %0 = vector.load %arg5[%c0, %c0_0] : memref<64x64xf32, #tpu.memory_space<vmem>>, vector<64x64xf32>
    %c0_1 = arith.constant 0 : index
    %c0_2 = arith.constant 0 : index
    %1 = vector.load %arg4[%c0_1, %c0_2] : memref<1x64xf32, #tpu.memory_space<vmem>>, vector<1x64xf32>
    %c0_3 = arith.constant 0 : index
    %c0_4 = arith.constant 0 : index
    %2 = vector.load %arg2[%c0_3, %c0_4] : memref<8x8xf32, #tpu.memory_space<vmem>>, vector<8x8xf32>
    %3 = vector.shape_cast %2 : vector<8x8xf32> to vector<8x8x1xf32>
    %c0_5 = arith.constant 0 : index
    %c0_6 = arith.constant 0 : index
    %4 = vector.load %arg3[%c0_5, %c0_6] : memref<1x64xf32, #tpu.memory_space<vmem>>, vector<1x64xf32>
    %5 = vector.shape_cast %4 : vector<1x64xf32> to vector<1x1x64xf32>
    %6 = vector.broadcast %3 : vector<8x8x1xf32> to vector<8x8x64xf32>
    %7 = vector.broadcast %5 : vector<1x1x64xf32> to vector<8x8x64xf32>
    %8 = arith.mulf %6, %7 : vector<8x8x64xf32>
    %9 = vector.shape_cast %1 : vector<1x64xf32> to vector<1x1x64xf32>
    %10 = vector.broadcast %9 : vector<1x1x64xf32> to vector<8x8x64xf32>
    %11 = arith.addf %8, %10 : vector<8x8x64xf32>
    %c0_7 = arith.constant 0 : index
    %c0_8 = arith.constant 0 : index
    %c0_9 = arith.constant 0 : index
    %12 = vector.load %arg9[%c0_7, %c0_8, %c0_9] : memref<8x8x64xf32, #tpu.memory_space<vmem>>, vector<8x8x64xf32>
    tpu.vector_store %arg9[%c0_7, %c0_8, %c0_9], %11 {strides = array<i32>} : memref<8x8x64xf32, #tpu.memory_space<vmem>>, vector<8x8x64xf32>,
    %13 = tpu.iota {dimensions = array<i32: 1>} : vector<8x64xi32>
    %c32_i32 = arith.constant 32 : i32
    %14 = vector.broadcast %c32_i32 : i32 to vector<8x64xi32>
    %15 = arith.cmpi slt, %13, %14 : vector<8x64xi32>
    %c0_i32 = arith.constant 0 : i32
    %16 = arith.cmpi eq, %arg1, %c0_i32 : i32
    %17 = arith.extui %16 : i1 to i32
    %c0_i32_10 = arith.constant 0 : i32
    %18 = arith.cmpi ne, %17, %c0_i32_10 : i32
    scf.if %18 {
      %c0_73 = arith.constant 0 : index
      %c0_74 = arith.constant 0 : index
      %c0_75 = arith.constant 0 : index
      %117 = vector.load %arg9[%c0_73, %c0_74, %c0_75] : memref<8x8x64xf32, #tpu.memory_space<vmem>>, vector<1x8x64xf32>
      %118 = vector.shape_cast %117 : vector<1x8x64xf32> to vector<8x64xf32>
      %119 = math.tanh %118 : vector<8x64xf32>
      %cst_76 = arith.constant 0.000000e+00 : f32
      %120 = vector.broadcast %cst_76 : f32 to vector<8x64xf32>
      %121 = arith.select %15, %119, %120 : vector<8x64xi1>, vector<8x64xf32>
      %c0_77 = arith.constant 0 : index
      %c0_78 = arith.constant 0 : index
      %122 = vector.load %arg10[%c0_77, %c0_78] : memref<8x64xf32, #tpu.memory_space<vmem>>, vector<8x64xf32>
      tpu.vector_store %arg10[%c0_77, %c0_78], %121 {strides = array<i32>} : memref<8x64xf32, #tpu.memory_space<vmem>>, vector<8x64xf32>,
    } else {
    }
    %c0_i32_11 = arith.constant 0 : i32
    %19 = arith.cmpi ne, %arg1, %c0_i32_11 : i32
    %20 = arith.extui %19 : i1 to i32
    %c0_i32_12 = arith.constant 0 : i32
    %21 = arith.cmpi ne, %20, %c0_i32_12 : i32
    scf.if %21 {
      %c0_73 = arith.constant 0 : index
      %c0_74 = arith.constant 0 : index
      %117 = vector.load %arg10[%c0_73, %c0_74] : memref<8x64xf32, #tpu.memory_space<vmem>>, vector<8x64xf32>
      %c0_75 = arith.constant 0 : index
      %c0_76 = arith.constant 0 : index
      %c0_77 = arith.constant 0 : index
      %118 = vector.load %arg9[%c0_75, %c0_76, %c0_77] : memref<8x8x64xf32, #tpu.memory_space<vmem>>, vector<1x8x64xf32>
      %119 = vector.shape_cast %118 : vector<1x8x64xf32> to vector<8x64xf32>
      %cst_78 = arith.constant dense<0.000000e+00> : vector<8x64xf32>
      %120 = tpu.matmul %117, %0, %cst_78 {dimension_numbers = #tpu.dot_dimension_numbers<[1], [0], [0], [1], [0, 0, 1, 1], [], []>} : vector<8x64xf32>, vector<64x64xf32>, vector<8x64xf32> -> vector<8x64xf32>
      %121 = arith.addf %120, %119 : vector<8x64xf32>
      %122 = math.tanh %121 : vector<8x64xf32>
      %c0_79 = arith.constant 0 : index
      %c0_80 = arith.constant 0 : index
      %123 = vector.load %arg10[%c0_79, %c0_80] : memref<8x64xf32, #tpu.memory_space<vmem>>, vector<8x64xf32>
      tpu.vector_store %arg10[%c0_79, %c0_80], %122 {strides = array<i32>} : memref<8x64xf32, #tpu.memory_space<vmem>>, vector<8x64xf32>,
    } else {
    }
    %c0_13 = arith.constant 0 : index
    %c0_14 = arith.constant 0 : index
    %22 = vector.load %arg10[%c0_13, %c0_14] : memref<8x64xf32, #tpu.memory_space<vmem>>, vector<8x64xf32>
    %c1_i32 = arith.constant 1 : i32
    %23 = arith.index_cast %c1_i32 : i32 to index
    %c0_15 = arith.constant 0 : index
    %c0_16 = arith.constant 0 : index
    %24 = vector.load %arg9[%23, %c0_15, %c0_16] : memref<8x8x64xf32, #tpu.memory_space<vmem>>, vector<1x8x64xf32>
    %25 = vector.shape_cast %24 : vector<1x8x64xf32> to vector<8x64xf32>
    %cst = arith.constant dense<0.000000e+00> : vector<8x64xf32>
    %26 = tpu.matmul %22, %0, %cst {dimension_numbers = #tpu.dot_dimension_numbers<[1], [0], [0], [1], [0, 0, 1, 1], [], []>} : vector<8x64xf32>, vector<64x64xf32>, vector<8x64xf32> -> vector<8x64xf32>
    %27 = arith.addf %26, %25 : vector<8x64xf32>
    %28 = math.tanh %27 : vector<8x64xf32>
    %c1_i32_17 = arith.constant 1 : i32
    %29 = arith.subi %c1_i32, %c1_i32_17 : i32
    %30 = arith.index_cast %29 : i32 to index
    %c0_18 = arith.constant 0 : index
    %c0_19 = arith.constant 0 : index
    %31 = vector.load %arg9[%30, %c0_18, %c0_19] : memref<8x8x64xf32, #tpu.memory_space<vmem>>, vector<1x8x64xf32>
    %32 = vector.shape_cast %31 : vector<1x8x64xf32> to vector<8x64xf32>
    %33 = vector.shape_cast %28 : vector<8x64xf32> to vector<1x8x64xf32>
    tpu.vector_store %arg9[%30, %c0_18, %c0_19], %33 {strides = array<i32>} : memref<8x8x64xf32, #tpu.memory_space<vmem>>, vector<1x8x64xf32>,
    %c2_i32 = arith.constant 2 : i32
    %34 = arith.index_cast %c2_i32 : i32 to index
    %c0_20 = arith.constant 0 : index
    %c0_21 = arith.constant 0 : index
    %35 = vector.load %arg9[%34, %c0_20, %c0_21] : memref<8x8x64xf32, #tpu.memory_space<vmem>>, vector<1x8x64xf32>
    %36 = vector.shape_cast %35 : vector<1x8x64xf32> to vector<8x64xf32>
    %cst_22 = arith.constant dense<0.000000e+00> : vector<8x64xf32>
    %37 = tpu.matmul %28, %0, %cst_22 {dimension_numbers = #tpu.dot_dimension_numbers<[1], [0], [0], [1], [0, 0, 1, 1], [], []>} : vector<8x64xf32>, vector<64x64xf32>, vector<8x64xf32> -> vector<8x64xf32>
    %38 = arith.addf %37, %36 : vector<8x64xf32>
    %39 = math.tanh %38 : vector<8x64xf32>
    %c1_i32_23 = arith.constant 1 : i32
    %40 = arith.subi %c2_i32, %c1_i32_23 : i32
    %41 = arith.index_cast %40 : i32 to index
    %c0_24 = arith.constant 0 : index
    %c0_25 = arith.constant 0 : index
    %42 = vector.load %arg9[%41, %c0_24, %c0_25] : memref<8x8x64xf32, #tpu.memory_space<vmem>>, vector<1x8x64xf32>
    %43 = vector.shape_cast %42 : vector<1x8x64xf32> to vector<8x64xf32>
    %44 = vector.shape_cast %39 : vector<8x64xf32> to vector<1x8x64xf32>
    tpu.vector_store %arg9[%41, %c0_24, %c0_25], %44 {strides = array<i32>} : memref<8x8x64xf32, #tpu.memory_space<vmem>>, vector<1x8x64xf32>,
    %c3_i32 = arith.constant 3 : i32
    %45 = arith.index_cast %c3_i32 : i32 to index
    %c0_26 = arith.constant 0 : index
    %c0_27 = arith.constant 0 : index
    %46 = vector.load %arg9[%45, %c0_26, %c0_27] : memref<8x8x64xf32, #tpu.memory_space<vmem>>, vector<1x8x64xf32>
    %47 = vector.shape_cast %46 : vector<1x8x64xf32> to vector<8x64xf32>
    %cst_28 = arith.constant dense<0.000000e+00> : vector<8x64xf32>
    %48 = tpu.matmul %39, %0, %cst_28 {dimension_numbers = #tpu.dot_dimension_numbers<[1], [0], [0], [1], [0, 0, 1, 1], [], []>} : vector<8x64xf32>, vector<64x64xf32>, vector<8x64xf32> -> vector<8x64xf32>
    %49 = arith.addf %48, %47 : vector<8x64xf32>
    %50 = math.tanh %49 : vector<8x64xf32>
    %c1_i32_29 = arith.constant 1 : i32
    %51 = arith.subi %c3_i32, %c1_i32_29 : i32
    %52 = arith.index_cast %51 : i32 to index
    %c0_30 = arith.constant 0 : index
    %c0_31 = arith.constant 0 : index
    %53 = vector.load %arg9[%52, %c0_30, %c0_31] : memref<8x8x64xf32, #tpu.memory_space<vmem>>, vector<1x8x64xf32>
    %54 = vector.shape_cast %53 : vector<1x8x64xf32> to vector<8x64xf32>
    %55 = vector.shape_cast %50 : vector<8x64xf32> to vector<1x8x64xf32>
    tpu.vector_store %arg9[%52, %c0_30, %c0_31], %55 {strides = array<i32>} : memref<8x8x64xf32, #tpu.memory_space<vmem>>, vector<1x8x64xf32>,
    %c4_i32 = arith.constant 4 : i32
    %56 = arith.index_cast %c4_i32 : i32 to index
    %c0_32 = arith.constant 0 : index
    %c0_33 = arith.constant 0 : index
    %57 = vector.load %arg9[%56, %c0_32, %c0_33] : memref<8x8x64xf32, #tpu.memory_space<vmem>>, vector<1x8x64xf32>
    %58 = vector.shape_cast %57 : vector<1x8x64xf32> to vector<8x64xf32>
    %cst_34 = arith.constant dense<0.000000e+00> : vector<8x64xf32>
    %59 = tpu.matmul %50, %0, %cst_34 {dimension_numbers = #tpu.dot_dimension_numbers<[1], [0], [0], [1], [0, 0, 1, 1], [], []>} : vector<8x64xf32>, vector<64x64xf32>, vector<8x64xf32> -> vector<8x64xf32>
    %60 = arith.addf %59, %58 : vector<8x64xf32>
    %61 = math.tanh %60 : vector<8x64xf32>
    %c1_i32_35 = arith.constant 1 : i32
    %62 = arith.subi %c4_i32, %c1_i32_35 : i32
    %63 = arith.index_cast %62 : i32 to index
    %c0_36 = arith.constant 0 : index
    %c0_37 = arith.constant 0 : index
    %64 = vector.load %arg9[%63, %c0_36, %c0_37] : memref<8x8x64xf32, #tpu.memory_space<vmem>>, vector<1x8x64xf32>
    %65 = vector.shape_cast %64 : vector<1x8x64xf32> to vector<8x64xf32>
    %66 = vector.shape_cast %61 : vector<8x64xf32> to vector<1x8x64xf32>
    tpu.vector_store %arg9[%63, %c0_36, %c0_37], %66 {strides = array<i32>} : memref<8x8x64xf32, #tpu.memory_space<vmem>>, vector<1x8x64xf32>,
    %c5_i32 = arith.constant 5 : i32
    %67 = arith.index_cast %c5_i32 : i32 to index
    %c0_38 = arith.constant 0 : index
    %c0_39 = arith.constant 0 : index
    %68 = vector.load %arg9[%67, %c0_38, %c0_39] : memref<8x8x64xf32, #tpu.memory_space<vmem>>, vector<1x8x64xf32>
    %69 = vector.shape_cast %68 : vector<1x8x64xf32> to vector<8x64xf32>
    %cst_40 = arith.constant dense<0.000000e+00> : vector<8x64xf32>
    %70 = tpu.matmul %61, %0, %cst_40 {dimension_numbers = #tpu.dot_dimension_numbers<[1], [0], [0], [1], [0, 0, 1, 1], [], []>} : vector<8x64xf32>, vector<64x64xf32>, vector<8x64xf32> -> vector<8x64xf32>
    %71 = arith.addf %70, %69 : vector<8x64xf32>
    %72 = math.tanh %71 : vector<8x64xf32>
    %c1_i32_41 = arith.constant 1 : i32
    %73 = arith.subi %c5_i32, %c1_i32_41 : i32
    %74 = arith.index_cast %73 : i32 to index
    %c0_42 = arith.constant 0 : index
    %c0_43 = arith.constant 0 : index
    %75 = vector.load %arg9[%74, %c0_42, %c0_43] : memref<8x8x64xf32, #tpu.memory_space<vmem>>, vector<1x8x64xf32>
    %76 = vector.shape_cast %75 : vector<1x8x64xf32> to vector<8x64xf32>
    %77 = vector.shape_cast %72 : vector<8x64xf32> to vector<1x8x64xf32>
    tpu.vector_store %arg9[%74, %c0_42, %c0_43], %77 {strides = array<i32>} : memref<8x8x64xf32, #tpu.memory_space<vmem>>, vector<1x8x64xf32>,
    %c6_i32 = arith.constant 6 : i32
    %78 = arith.index_cast %c6_i32 : i32 to index
    %c0_44 = arith.constant 0 : index
    %c0_45 = arith.constant 0 : index
    %79 = vector.load %arg9[%78, %c0_44, %c0_45] : memref<8x8x64xf32, #tpu.memory_space<vmem>>, vector<1x8x64xf32>
    %80 = vector.shape_cast %79 : vector<1x8x64xf32> to vector<8x64xf32>
    %cst_46 = arith.constant dense<0.000000e+00> : vector<8x64xf32>
    %81 = tpu.matmul %72, %0, %cst_46 {dimension_numbers = #tpu.dot_dimension_numbers<[1], [0], [0], [1], [0, 0, 1, 1], [], []>} : vector<8x64xf32>, vector<64x64xf32>, vector<8x64xf32> -> vector<8x64xf32>
    %82 = arith.addf %81, %80 : vector<8x64xf32>
    %83 = math.tanh %82 : vector<8x64xf32>
    %c1_i32_47 = arith.constant 1 : i32
    %84 = arith.subi %c6_i32, %c1_i32_47 : i32
    %85 = arith.index_cast %84 : i32 to index
    %c0_48 = arith.constant 0 : index
    %c0_49 = arith.constant 0 : index
    %86 = vector.load %arg9[%85, %c0_48, %c0_49] : memref<8x8x64xf32, #tpu.memory_space<vmem>>, vector<1x8x64xf32>
    %87 = vector.shape_cast %86 : vector<1x8x64xf32> to vector<8x64xf32>
    %88 = vector.shape_cast %83 : vector<8x64xf32> to vector<1x8x64xf32>
    tpu.vector_store %arg9[%85, %c0_48, %c0_49], %88 {strides = array<i32>} : memref<8x8x64xf32, #tpu.memory_space<vmem>>, vector<1x8x64xf32>,
    %c7_i32 = arith.constant 7 : i32
    %89 = arith.index_cast %c7_i32 : i32 to index
    %c0_50 = arith.constant 0 : index
    %c0_51 = arith.constant 0 : index
    %90 = vector.load %arg9[%89, %c0_50, %c0_51] : memref<8x8x64xf32, #tpu.memory_space<vmem>>, vector<1x8x64xf32>
    %91 = vector.shape_cast %90 : vector<1x8x64xf32> to vector<8x64xf32>
    %cst_52 = arith.constant dense<0.000000e+00> : vector<8x64xf32>
    %92 = tpu.matmul %83, %0, %cst_52 {dimension_numbers = #tpu.dot_dimension_numbers<[1], [0], [0], [1], [0, 0, 1, 1], [], []>} : vector<8x64xf32>, vector<64x64xf32>, vector<8x64xf32> -> vector<8x64xf32>
    %93 = arith.addf %92, %91 : vector<8x64xf32>
    %94 = math.tanh %93 : vector<8x64xf32>
    %c1_i32_53 = arith.constant 1 : i32
    %95 = arith.subi %c7_i32, %c1_i32_53 : i32
    %96 = arith.index_cast %95 : i32 to index
    %c0_54 = arith.constant 0 : index
    %c0_55 = arith.constant 0 : index
    %97 = vector.load %arg9[%96, %c0_54, %c0_55] : memref<8x8x64xf32, #tpu.memory_space<vmem>>, vector<1x8x64xf32>
    %98 = vector.shape_cast %97 : vector<1x8x64xf32> to vector<8x64xf32>
    %99 = vector.shape_cast %94 : vector<8x64xf32> to vector<1x8x64xf32>
    tpu.vector_store %arg9[%96, %c0_54, %c0_55], %99 {strides = array<i32>} : memref<8x8x64xf32, #tpu.memory_space<vmem>>, vector<1x8x64xf32>,
    %c7_i32_56 = arith.constant 7 : i32
    %c0_57 = arith.constant 0 : index
    %c0_58 = arith.constant 0 : index
    %100 = vector.load %arg10[%c0_57, %c0_58] : memref<8x64xf32, #tpu.memory_space<vmem>>, vector<8x64xf32>
    tpu.vector_store %arg10[%c0_57, %c0_58], %94 {strides = array<i32>} : memref<8x64xf32, #tpu.memory_space<vmem>>, vector<8x64xf32>,
    %cst_59 = arith.constant dense<0.000000e+00> : vector<8x64xf32>
    %101 = tpu.matmul %94, %0, %cst_59 {dimension_numbers = #tpu.dot_dimension_numbers<[1], [0], [0], [1], [0, 0, 1, 1], [], []>} : vector<8x64xf32>, vector<64x64xf32>, vector<8x64xf32> -> vector<8x64xf32>
    %102 = vector.broadcast %1 : vector<1x64xf32> to vector<8x64xf32>
    %103 = arith.addf %101, %102 : vector<8x64xf32>
    %104 = math.tanh %103 : vector<8x64xf32>
    %c7 = arith.constant 7 : index
    %c0_60 = arith.constant 0 : index
    %c0_61 = arith.constant 0 : index
    %105 = vector.load %arg9[%c7, %c0_60, %c0_61] : memref<8x8x64xf32, #tpu.memory_space<vmem>>, vector<1x8x64xf32>
    %106 = vector.shape_cast %105 : vector<1x8x64xf32> to vector<8x64xf32>
    %107 = vector.shape_cast %104 : vector<8x64xf32> to vector<1x8x64xf32>
    tpu.vector_store %arg9[%c7, %c0_60, %c0_61], %107 {strides = array<i32>} : memref<8x8x64xf32, #tpu.memory_space<vmem>>, vector<1x8x64xf32>,
    %c0_62 = arith.constant 0 : index
    %c0_63 = arith.constant 0 : index
    %c0_64 = arith.constant 0 : index
    %108 = vector.load %arg9[%c0_62, %c0_63, %c0_64] : memref<8x8x64xf32, #tpu.memory_space<vmem>>, vector<8x8x64xf32>
    %109 = vector.shape_cast %108 : vector<8x8x64xf32> to vector<64x64xf32>
    %c0_65 = arith.constant 0 : index
    %c0_66 = arith.constant 0 : index
    %110 = vector.load %arg6[%c0_65, %c0_66] : memref<64x10xf32, #tpu.memory_space<vmem>>, vector<64x10xf32>
    %cst_67 = arith.constant dense<0.000000e+00> : vector<64x10xf32>
    %111 = tpu.matmul %109, %110, %cst_67 {dimension_numbers = #tpu.dot_dimension_numbers<[1], [0], [0], [1], [0, 0, 1, 1], [], []>} : vector<64x64xf32>, vector<64x10xf32>, vector<64x10xf32> -> vector<64x10xf32>
    %c0_68 = arith.constant 0 : index
    %c0_69 = arith.constant 0 : index
    %112 = vector.load %arg7[%c0_68, %c0_69] : memref<1x10xf32, #tpu.memory_space<vmem>>, vector<1x10xf32>
    %113 = vector.broadcast %112 : vector<1x10xf32> to vector<64x10xf32>
    %114 = arith.addf %111, %113 : vector<64x10xf32>
    %115 = vector.shape_cast %114 : vector<64x10xf32> to vector<8x8x10xf32>
    %c0_70 = arith.constant 0 : index
    %c0_71 = arith.constant 0 : index
    %c0_72 = arith.constant 0 : index
    %116 = vector.load %arg8[%c0_70, %c0_71, %c0_72] : memref<8x8x10xf32, #tpu.memory_space<vmem>>, vector<8x8x10xf32>
    tpu.vector_store %arg8[%c0_70, %c0_71, %c0_72], %115 {strides = array<i32>} : memref<8x8x10xf32, #tpu.memory_space<vmem>>, vector<8x8x10xf32>,
    return
  }
  func.func @transform_0(%arg0: i32, %arg1: i32) -> (i32, i32) {
    %c0_i32 = arith.constant 0 : i32
    return %arg1, %arg0 : i32, i32
  }
  func.func @transform_1(%arg0: i32, %arg1: i32) -> (i32, i32) {
    %c0_i32 = arith.constant 0 : i32
    %c0_i32_0 = arith.constant 0 : i32
    %c0_i32_1 = arith.constant 0 : i32
    return %c0_i32, %c0_i32_0 : i32, i32
  }
  func.func @transform_2(%arg0: i32, %arg1: i32) -> (i32, i32) {
    %c0_i32 = arith.constant 0 : i32
    %c0_i32_0 = arith.constant 0 : i32
    %c0_i32_1 = arith.constant 0 : i32
    return %c0_i32, %c0_i32_0 : i32, i32
  }
  func.func @transform_3(%arg0: i32, %arg1: i32) -> (i32, i32) {
    %c0_i32 = arith.constant 0 : i32
    %c0_i32_0 = arith.constant 0 : i32
    %c0_i32_1 = arith.constant 0 : i32
    return %c0_i32, %c0_i32_0 : i32, i32
  }
  func.func @transform_4(%arg0: i32, %arg1: i32) -> (i32, i32) {
    %c0_i32 = arith.constant 0 : i32
    %c0_i32_0 = arith.constant 0 : i32
    %c0_i32_1 = arith.constant 0 : i32
    return %c0_i32, %c0_i32_0 : i32, i32
  }
  func.func @transform_5(%arg0: i32, %arg1: i32) -> (i32, i32) {
    %c0_i32 = arith.constant 0 : i32
    %c0_i32_0 = arith.constant 0 : i32
    %c0_i32_1 = arith.constant 0 : i32
    return %c0_i32, %c0_i32_0 : i32, i32
  }
  func.func @transform_6(%arg0: i32, %arg1: i32) -> (i32, i32, i32) {
    %c0_i32 = arith.constant 0 : i32
    %c0_i32_0 = arith.constant 0 : i32
    return %arg1, %arg0, %c0_i32 : i32, i32, i32
  }
}

</mosaic_0001>

<llo_original>
// kernel: tpu_custom_call.1
$region0: #{tpu_custom_call.1}
  #allocation0 [shape = 'u32[]', space=smem, size = 0x4, offset = 0x4, fixed_abs, tag = 'smem constant byte address 0x4 - core index']
  #allocation1 [shape = 'u32[144,128]{1,0:T(1,128)}', space=vmem, size = 0x12000, scoped, tag = 'internal scratch']
  #allocation2 [shape = 'f32[8,8,64]{2,1,0:T(8,128)}', space=vmem, size = 0x8000, scoped, tag = 'scratch operand']
  #allocation3 [shape = 'f32[8,64]{1,0:T(8,128)}', space=vmem, size = 0x1000, scoped, tag = 'scratch operand']
  %s0 = inlined_call_operand.vmem [shape: f32[8,8], index: 0, kind: input, shape index: {}]
  %s1 = inlined_call_operand.vmem [shape: f32[1,64], index: 1, kind: input, shape index: {}]
  %s2 = inlined_call_operand.vmem [shape: f32[1,64], index: 2, kind: input, shape index: {}]
  %s3 = inlined_call_operand.vmem [shape: f32[64,64], index: 3, kind: input, shape index: {}]
  %s4 = inlined_call_operand.vmem [shape: f32[64,10], index: 4, kind: input, shape index: {}]
  %s5 = inlined_call_operand.vmem [shape: f32[1,10], index: 5, kind: input, shape index: {}]
  %s6 = inlined_call_operand.hbm [shape: f32[8,8,10], index: 6, kind: output, shape index: {}]
  %s7 = sld [smem:[#allocation0]]
  $region42: #{tpu_custom_call.1} parent=0
    _
  %s9 = ssub.s32 1, %s7
  %s10 = scalar_select 0, %s9, %s7
  $region1: #{tpu_custom_call.1} parent=0
    #allocation4 [shape = 'u8[32768]{0}', space=vmem, size = 0x8000, scoped, tag = 'output window, operand 0, single buffered']
    #allocation5 [shape = 's32[1]{0}', space=sflag, size = 0x4, scoped, tag = 'scoped memory for tpu_custom_call.1']
    %11 = vsyncpa [#allocation5], 0
    // Predicated region
    $region2: #{tpu_custom_call.1} parent=1 // pred_check
      _
    $region3: #{tpu_custom_call.1} parent=1 // pred_check_branch
      %13 = sbr.rel (0) target = $region5
    $region4: #{tpu_custom_call.1} parent=1 // pred_region
      _
    $region5: #{tpu_custom_call.1} parent=1 // pred_fallthru
      _
    // Predicated region
    $region6: #{tpu_custom_call.1} parent=1 // pred_check
      _
    $region7: #{tpu_custom_call.1} parent=1 // pred_check_branch
      %15 = sbr.rel (0) target = $region9
    $region8: #{tpu_custom_call.1} parent=1 // pred_region
      _
    $region9: #{tpu_custom_call.1} parent=1 // pred_fallthru
      _
    // Predicated region
    $region10: #{tpu_custom_call.1} parent=1 // pred_check
      _
    $region11: #{tpu_custom_call.1} parent=1 // pred_check_branch
      %17 = sbr.rel (0) target = $region13
    $region12: #{tpu_custom_call.1} parent=1 // pred_region
      _
    $region13: #{tpu_custom_call.1} parent=1 // pred_fallthru
      _
    // Predicated region
    $region14: #{tpu_custom_call.1} parent=1 // pred_check
      _
    $region15: #{tpu_custom_call.1} parent=1 // pred_check_branch
      %19 = sbr.rel (0) target = $region17
    $region16: #{tpu_custom_call.1} parent=1 // pred_region
      _
    $region17: #{tpu_custom_call.1} parent=1 // pred_fallthru
      _
    // Predicated region
    $region18: #{tpu_custom_call.1} parent=1 // pred_check
      _
    $region19: #{tpu_custom_call.1} parent=1 // pred_check_branch
      %21 = sbr.rel (0) target = $region21
    $region20: #{tpu_custom_call.1} parent=1 // pred_region
      _
    $region21: #{tpu_custom_call.1} parent=1 // pred_fallthru
      _
    // Predicated region
    $region22: #{tpu_custom_call.1} parent=1 // pred_check
      _
    $region23: #{tpu_custom_call.1} parent=1 // pred_check_branch
      %23 = sbr.rel (0) target = $region25
    $region24: #{tpu_custom_call.1} parent=1 // pred_region
      _
    $region25: #{tpu_custom_call.1} parent=1 // pred_fallthru
      _
    %v24 = vld [vmem:[%s3] sm:$0xff]
    %v25 = vld [vmem:[%s3 + $0x8] sm:$0xff]
    %v26 = vld [vmem:[%s3 + $0x10] sm:$0xff]
    %v27 = vld [vmem:[%s3 + $0x18] sm:$0xff]
    %v28 = vld [vmem:[%s3 + $0x20] sm:$0xff]
    %v29 = vld [vmem:[%s3 + $0x28] sm:$0xff]
    %v30 = vld [vmem:[%s3 + $0x30] sm:$0xff]
    %v31 = vld [vmem:[%s3 + $0x38] sm:$0xff]
    %v32 = vld [vmem:[%s2] sm:$0x1]
    %v33 = vld [vmem:[%s0] sm:$0xff]
    %v34 = vlaneseq
    %v35 = vshrl.u32 %v34, 7
    %v36 = vsub.s32 0, %v35
    %v37 = vrot.slane %v33, %v36
    %39 = vbcast.lane.b32.xlu0 %v37, 256
    %v40 = vpop.permute.xlu0 %39
    %v41 = vlaneseq
    %v42 = vshrl.u32 %v41, 7
    %v43 = vsub.s32 1, %v42
    %v44 = vrot.slane %v33, %v43
    %46 = vbcast.lane.b32.xlu0 %v44, 256
    %v47 = vpop.permute.xlu0 %46
    %v48 = vlaneseq
    %v49 = vshrl.u32 %v48, 7
    %v50 = vsub.s32 2, %v49
    %v51 = vrot.slane %v33, %v50
    %53 = vbcast.lane.b32.xlu0 %v51, 256
    %v54 = vpop.permute.xlu0 %53
    %v55 = vlaneseq
    %v56 = vshrl.u32 %v55, 7
    %v57 = vsub.s32 3, %v56
    %v58 = vrot.slane %v33, %v57
    %60 = vbcast.lane.b32.xlu0 %v58, 256
    %v61 = vpop.permute.xlu0 %60
    %v62 = vlaneseq
    %v63 = vshrl.u32 %v62, 7
    %v64 = vsub.s32 4, %v63
    %v65 = vrot.slane %v33, %v64
    %67 = vbcast.lane.b32.xlu0 %v65, 256
    %v68 = vpop.permute.xlu0 %67
    %v69 = vlaneseq
    %v70 = vshrl.u32 %v69, 7
    %v71 = vsub.s32 5, %v70
    %v72 = vrot.slane %v33, %v71
    %74 = vbcast.lane.b32.xlu0 %v72, 256
    %v75 = vpop.permute.xlu0 %74
    %v76 = vlaneseq
    %v77 = vshrl.u32 %v76, 7
    %v78 = vsub.s32 6, %v77
    %v79 = vrot.slane %v33, %v78
    %81 = vbcast.lane.b32.xlu0 %v79, 256
    %v82 = vpop.permute.xlu0 %81
    %v83 = vlaneseq
    %v84 = vshrl.u32 %v83, 7
    %v85 = vsub.s32 7, %v84
    %v86 = vrot.slane %v33, %v85
    %88 = vbcast.lane.b32.xlu0 %v86, 256
    %v89 = vpop.permute.xlu0 %88
    %v90 = vld [vmem:[%s1] sm:$0x1]
    %v92 = vlaneseq
    %v93 = vshrl.u32 %v92, 7
    %v94 = vsub.s32 0, %v93
    %v95 = vrot.slane %v90, %v94
    %v97 = vmul.f32 %v40, %v95
    %v98 = vmul.f32 %v47, %v95
    %v99 = vmul.f32 %v54, %v95
    %v100 = vmul.f32 %v61, %v95
    %v101 = vmul.f32 %v68, %v95
    %v102 = vmul.f32 %v75, %v95
    %v103 = vmul.f32 %v82, %v95
    %v104 = vmul.f32 %v89, %v95
    %v106 = vlaneseq
    %v107 = vshrl.u32 %v106, 7
    %v108 = vsub.s32 0, %v107
    %v109 = vrot.slane %v32, %v108
    %v111 = vadd.f32 %v97, %v109
    %v112 = vadd.f32 %v98, %v109
    %v113 = vadd.f32 %v99, %v109
    %v114 = vadd.f32 %v100, %v109
    %v115 = vadd.f32 %v101, %v109
    %v116 = vadd.f32 %v102, %v109
    %v117 = vadd.f32 %v103, %v109
    %v118 = vadd.f32 %v104, %v109
    %vm119 = vcmask 523264
    %120 = vst.msk [vmem:[#allocation2] sm:$0xff] %vm119, %v111
    %121 = vst.msk [vmem:[#allocation2 + $0x8] sm:$0xff] %vm119, %v112
    %122 = vst.msk [vmem:[#allocation2 + $0x10] sm:$0xff] %vm119, %v113
    %123 = vst.msk [vmem:[#allocation2 + $0x18] sm:$0xff] %vm119, %v114
    %124 = vst.msk [vmem:[#allocation2 + $0x20] sm:$0xff] %vm119, %v115
    %125 = vst.msk [vmem:[#allocation2 + $0x28] sm:$0xff] %vm119, %v116
    %126 = vst.msk [vmem:[#allocation2 + $0x30] sm:$0xff] %vm119, %v117
    %127 = vst.msk [vmem:[#allocation2 + $0x38] sm:$0xff] %vm119, %v118
    %v128 = vlaneseq
    %v129 = vand.u32 %v128, 127
    %vm130 = vcmp.lt.s32.totalorder %v129, 32
    %p131 = scmp.eq.s32.totalorder 0, 0
    // Predicated region
    $region26: #{tpu_custom_call.1} parent=1 // pred_check
      %p132 = pneg %p131
    $region27: #{tpu_custom_call.1} parent=1 // pred_check_branch
      %134 = sbr.rel (%p132) target = $region29
    $region28: #{tpu_custom_call.1} parent=1 // pred_region
      %v135 = vld [vmem:[#allocation2] sm:$0xff]
      %v136 = vtanh.pop %v135
      %v137 = vsel %vm130, %v136, 0.0
      %138 = vst.msk [vmem:[#allocation3] sm:$0xff] %vm119, %v137
    $region29: #{tpu_custom_call.1} parent=1 // pred_fallthru
      _
    %p139 = scmp.ne.s32.totalorder 0, 0
    // Predicated region
    $region30: #{tpu_custom_call.1} parent=1 // pred_check
      %p140 = pneg %p139
    $region31: #{tpu_custom_call.1} parent=1 // pred_check_branch
      %142 = sbr.rel (%p140) target = $region33
    $region32: #{tpu_custom_call.1} parent=1 // pred_region
      %v143 = vld [vmem:[#allocation3] sm:$0xff]
      %v144 = vld [vmem:[#allocation2] sm:$0xff]
      %v146 = vsel %vm119, %v143, 0
      %148 = vmatprep.subr.mxu0 0.0
      %149 = vmatpush1.msra.mxu0 0.0
      %150 = vmatprep.subr.mxu0 0.0
      %151 = vmatpush1.msra.mxu0 0.0
      %152 = vmatprep.subr.mxu0 0.0
      %153 = vmatpush1.msra.mxu0 0.0
      %154 = vmatprep.subr.mxu0 0.0
      %155 = vmatpush1.msra.mxu0 0.0
      %156 = vmatprep.subr.mxu0 0.0
      %157 = vmatpush1.msra.mxu0 0.0
      %158 = vmatprep.subr.mxu0 0.0
      %159 = vmatpush1.msra.mxu0 0.0
      %160 = vmatprep.subr.mxu0 0.0
      %161 = vmatpush1.msra.mxu0 0.0
      %162 = vmatprep.subr.mxu0 0.0
      %163 = vmatpush1.msra.mxu0 0.0
      %164 = vmatprep.subr.mxu0 0.0
      %165 = vmatpush1.msra.mxu0 %v31
      %166 = vmatprep.subr.mxu0 0.0
      %167 = vmatpush1.msra.mxu0 %v30
      %168 = vmatprep.subr.mxu0 0.0
      %169 = vmatpush1.msra.mxu0 %v29
      %170 = vmatprep.subr.mxu0 0.0
      %171 = vmatpush1.msra.mxu0 %v28
      %172 = vmatprep.subr.mxu0 0.0
      %173 = vmatpush1.msra.mxu0 %v27
      %174 = vmatprep.subr.mxu0 0.0
      %175 = vmatpush1.msra.mxu0 %v26
      %176 = vmatprep.subr.mxu0 0.0
      %177 = vmatpush1.msra.mxu0 %v25
      %178 = vmatprep.subr.mxu0 0.0
      %179 = vmatpush1.msra.mxu0 %v24
      %180 = vmatprep.subr.mxu0 0.0
      %181 = vmatpush2.msra.mxu0 0.0
      %182 = vmatprep.subr.mxu0 0.0
      %183 = vmatpush2.msra.mxu0 0.0
      %184 = vmatprep.subr.mxu0 0.0
      %185 = vmatpush2.msra.mxu0 0.0
      %186 = vmatprep.subr.mxu0 0.0
      %187 = vmatpush2.msra.mxu0 0.0
      %188 = vmatprep.subr.mxu0 0.0
      %189 = vmatpush2.msra.mxu0 0.0
      %190 = vmatprep.subr.mxu0 0.0
      %191 = vmatpush2.msra.mxu0 0.0
      %192 = vmatprep.subr.mxu0 0.0
      %193 = vmatpush2.msra.mxu0 0.0
      %194 = vmatprep.subr.mxu0 0.0
      %195 = vmatpush2.msra.mxu0 0.0
      %196 = vmatprep.subr.mxu0 0.0
      %197 = vmatpush2.msra.mxu0 0.0
      %198 = vmatprep.subr.mxu0 0.0
      %199 = vmatpush2.msra.mxu0 0.0
      %200 = vmatprep.subr.mxu0 0.0
      %201 = vmatpush2.msra.mxu0 0.0
      %202 = vmatprep.subr.mxu0 0.0
      %203 = vmatpush2.msra.mxu0 0.0
      %204 = vmatprep.subr.mxu0 0.0
      %205 = vmatpush2.msra.mxu0 0.0
      %206 = vmatprep.subr.mxu0 0.0
      %207 = vmatpush2.msra.mxu0 0.0
      %208 = vmatprep.subr.mxu0 0.0
      %209 = vmatpush2.msra.mxu0 0.0
      %210 = vmatprep.subr.mxu0 0.0
      %211 = vmatpush2.msra.mxu0 0.0
      %212 = vmatprep.mubr.f32.mxu0 0.0
      %213 = vmatmul.mubr.f32.gmra.mxu0 %v146
      %v214 = vpop.f32.mrf.mxu0
      %v215 = vadd.f32 %v144, %v214
      %v216 = vpop.f32.mrf.mxu0
      %217 = vdwg.mxu0
      %v218 = vtanh.pop %v215
      %219 = vst.msk [vmem:[#allocation3] sm:$0xff] %vm119, %v218
    $region33: #{tpu_custom_call.1} parent=1 // pred_fallthru
      _
    %v220 = vld [vmem:[#allocation3] sm:$0xff]
    %s221 = scalar_lea.vmem [#allocation2], 8
    %v222 = vld [vmem:[%s221] sm:$0xff]
    %v224 = vsel %vm119, %v220, 0
    %226 = vmatprep.subr.mxu0 0.0
    %227 = vmatpush1.msra.mxu0 0.0
    %228 = vmatprep.subr.mxu0 0.0
    %229 = vmatpush1.msra.mxu0 0.0
    %230 = vmatprep.subr.mxu0 0.0
    %231 = vmatpush1.msra.mxu0 0.0
    %232 = vmatprep.subr.mxu0 0.0
    %233 = vmatpush1.msra.mxu0 0.0
    %234 = vmatprep.subr.mxu0 0.0
    %235 = vmatpush1.msra.mxu0 0.0
    %236 = vmatprep.subr.mxu0 0.0
    %237 = vmatpush1.msra.mxu0 0.0
    %238 = vmatprep.subr.mxu0 0.0
    %239 = vmatpush1.msra.mxu0 0.0
    %240 = vmatprep.subr.mxu0 0.0
    %241 = vmatpush1.msra.mxu0 0.0
    %242 = vmatprep.subr.mxu0 0.0
    %243 = vmatpush1.msra.mxu0 %v31
    %244 = vmatprep.subr.mxu0 0.0
    %245 = vmatpush1.msra.mxu0 %v30
    %246 = vmatprep.subr.mxu0 0.0
    %247 = vmatpush1.msra.mxu0 %v29
    %248 = vmatprep.subr.mxu0 0.0
    %249 = vmatpush1.msra.mxu0 %v28
    %250 = vmatprep.subr.mxu0 0.0
    %251 = vmatpush1.msra.mxu0 %v27
    %252 = vmatprep.subr.mxu0 0.0
    %253 = vmatpush1.msra.mxu0 %v26
    %254 = vmatprep.subr.mxu0 0.0
    %255 = vmatpush1.msra.mxu0 %v25
    %256 = vmatprep.subr.mxu0 0.0
    %257 = vmatpush1.msra.mxu0 %v24
    %258 = vmatprep.subr.mxu0 0.0
    %259 = vmatpush2.msra.mxu0 0.0
    %260 = vmatprep.subr.mxu0 0.0
    %261 = vmatpush2.msra.mxu0 0.0
    %262 = vmatprep.subr.mxu0 0.0
    %263 = vmatpush2.msra.mxu0 0.0
    %264 = vmatprep.subr.mxu0 0.0
    %265 = vmatpush2.msra.mxu0 0.0
    %266 = vmatprep.subr.mxu0 0.0
    %267 = vmatpush2.msra.mxu0 0.0
    %268 = vmatprep.subr.mxu0 0.0
    %269 = vmatpush2.msra.mxu0 0.0
    %270 = vmatprep.subr.mxu0 0.0
    %271 = vmatpush2.msra.mxu0 0.0
    %272 = vmatprep.subr.mxu0 0.0
    %273 = vmatpush2.msra.mxu0 0.0
    %274 = vmatprep.subr.mxu0 0.0
    %275 = vmatpush2.msra.mxu0 0.0
    %276 = vmatprep.subr.mxu0 0.0
    %277 = vmatpush2.msra.mxu0 0.0
    %278 = vmatprep.subr.mxu0 0.0
    %279 = vmatpush2.msra.mxu0 0.0
    %280 = vmatprep.subr.mxu0 0.0
    %281 = vmatpush2.msra.mxu0 0.0
    %282 = vmatprep.subr.mxu0 0.0
    %283 = vmatpush2.msra.mxu0 0.0
    %284 = vmatprep.subr.mxu0 0.0
    %285 = vmatpush2.msra.mxu0 0.0
    %286 = vmatprep.subr.mxu0 0.0
    %287 = vmatpush2.msra.mxu0 0.0
    %288 = vmatprep.subr.mxu0 0.0
    %289 = vmatpush2.msra.mxu0 0.0
    %290 = vmatprep.mubr.f32.mxu0 0.0
    %291 = vmatmul.mubr.f32.gmra.mxu0 %v224
    %v292 = vpop.f32.mrf.mxu0
    %v293 = vadd.f32 %v222, %v292
    %v294 = vpop.f32.mrf.mxu0
    %295 = vdwg.mxu0
    %v296 = vtanh.pop %v293
    %297 = vst.msk [vmem:[#allocation2] sm:$0xff] %vm119, %v296
    %s298 = scalar_lea.vmem [#allocation2], 16
    %v299 = vld [vmem:[%s298] sm:$0xff]
    %v301 = vsel %vm119, %v296, 0
    %303 = vmatprep.subr.mxu0 0.0
    %304 = vmatpush1.msra.mxu0 0.0
    %305 = vmatprep.subr.mxu0 0.0
    %306 = vmatpush1.msra.mxu0 0.0
    %307 = vmatprep.subr.mxu0 0.0
    %308 = vmatpush1.msra.mxu0 0.0
    %309 = vmatprep.subr.mxu0 0.0
    %310 = vmatpush1.msra.mxu0 0.0
    %311 = vmatprep.subr.mxu0 0.0
    %312 = vmatpush1.msra.mxu0 0.0
    %313 = vmatprep.subr.mxu0 0.0
    %314 = vmatpush1.msra.mxu0 0.0
    %315 = vmatprep.subr.mxu0 0.0
    %316 = vmatpush1.msra.mxu0 0.0
    %317 = vmatprep.subr.mxu0 0.0
    %318 = vmatpush1.msra.mxu0 0.0
    %319 = vmatprep.subr.mxu0 0.0
    %320 = vmatpush1.msra.mxu0 %v31
    %321 = vmatprep.subr.mxu0 0.0
    %322 = vmatpush1.msra.mxu0 %v30
    %323 = vmatprep.subr.mxu0 0.0
    %324 = vmatpush1.msra.mxu0 %v29
    %325 = vmatprep.subr.mxu0 0.0
    %326 = vmatpush1.msra.mxu0 %v28
    %327 = vmatprep.subr.mxu0 0.0
    %328 = vmatpush1.msra.mxu0 %v27
    %329 = vmatprep.subr.mxu0 0.0
    %330 = vmatpush1.msra.mxu0 %v26
    %331 = vmatprep.subr.mxu0 0.0
    %332 = vmatpush1.msra.mxu0 %v25
    %333 = vmatprep.subr.mxu0 0.0
    %334 = vmatpush1.msra.mxu0 %v24
    %335 = vmatprep.subr.mxu0 0.0
    %336 = vmatpush2.msra.mxu0 0.0
    %337 = vmatprep.subr.mxu0 0.0
    %338 = vmatpush2.msra.mxu0 0.0
    %339 = vmatprep.subr.mxu0 0.0
    %340 = vmatpush2.msra.mxu0 0.0
    %341 = vmatprep.subr.mxu0 0.0
    %342 = vmatpush2.msra.mxu0 0.0
    %343 = vmatprep.subr.mxu0 0.0
    %344 = vmatpush2.msra.mxu0 0.0
    %345 = vmatprep.subr.mxu0 0.0
    %346 = vmatpush2.msra.mxu0 0.0
    %347 = vmatprep.subr.mxu0 0.0
    %348 = vmatpush2.msra.mxu0 0.0
    %349 = vmatprep.subr.mxu0 0.0
    %350 = vmatpush2.msra.mxu0 0.0
    %351 = vmatprep.subr.mxu0 0.0
    %352 = vmatpush2.msra.mxu0 0.0
    %353 = vmatprep.subr.mxu0 0.0
    %354 = vmatpush2.msra.mxu0 0.0
    %355 = vmatprep.subr.mxu0 0.0
    %356 = vmatpush2.msra.mxu0 0.0
    %357 = vmatprep.subr.mxu0 0.0
    %358 = vmatpush2.msra.mxu0 0.0
    %359 = vmatprep.subr.mxu0 0.0
    %360 = vmatpush2.msra.mxu0 0.0
    %361 = vmatprep.subr.mxu0 0.0
    %362 = vmatpush2.msra.mxu0 0.0
    %363 = vmatprep.subr.mxu0 0.0
    %364 = vmatpush2.msra.mxu0 0.0
    %365 = vmatprep.subr.mxu0 0.0
    %366 = vmatpush2.msra.mxu0 0.0
    %367 = vmatprep.mubr.f32.mxu0 0.0
    %368 = vmatmul.mubr.f32.gmra.mxu0 %v301
    %v369 = vpop.f32.mrf.mxu0
    %v370 = vadd.f32 %v299, %v369
    %v371 = vpop.f32.mrf.mxu0
    %372 = vdwg.mxu0
    %v373 = vtanh.pop %v370
    %374 = vst.msk [vmem:[%s221] sm:$0xff] %vm119, %v373
    %s375 = scalar_lea.vmem [#allocation2], 24
    %v376 = vld [vmem:[%s375] sm:$0xff]
    %v378 = vsel %vm119, %v373, 0
    %380 = vmatprep.subr.mxu0 0.0
    %381 = vmatpush1.msra.mxu0 0.0
    %382 = vmatprep.subr.mxu0 0.0
    %383 = vmatpush1.msra.mxu0 0.0
    %384 = vmatprep.subr.mxu0 0.0
    %385 = vmatpush1.msra.mxu0 0.0
    %386 = vmatprep.subr.mxu0 0.0
    %387 = vmatpush1.msra.mxu0 0.0
    %388 = vmatprep.subr.mxu0 0.0
    %389 = vmatpush1.msra.mxu0 0.0
    %390 = vmatprep.subr.mxu0 0.0
    %391 = vmatpush1.msra.mxu0 0.0
    %392 = vmatprep.subr.mxu0 0.0
    %393 = vmatpush1.msra.mxu0 0.0
    %394 = vmatprep.subr.mxu0 0.0
    %395 = vmatpush1.msra.mxu0 0.0
    %396 = vmatprep.subr.mxu0 0.0
    %397 = vmatpush1.msra.mxu0 %v31
    %398 = vmatprep.subr.mxu0 0.0
    %399 = vmatpush1.msra.mxu0 %v30
    %400 = vmatprep.subr.mxu0 0.0
    %401 = vmatpush1.msra.mxu0 %v29
    %402 = vmatprep.subr.mxu0 0.0
    %403 = vmatpush1.msra.mxu0 %v28
    %404 = vmatprep.subr.mxu0 0.0
    %405 = vmatpush1.msra.mxu0 %v27
    %406 = vmatprep.subr.mxu0 0.0
    %407 = vmatpush1.msra.mxu0 %v26
    %408 = vmatprep.subr.mxu0 0.0
    %409 = vmatpush1.msra.mxu0 %v25
    %410 = vmatprep.subr.mxu0 0.0
    %411 = vmatpush1.msra.mxu0 %v24
    %412 = vmatprep.subr.mxu0 0.0
    %413 = vmatpush2.msra.mxu0 0.0
    %414 = vmatprep.subr.mxu0 0.0
    %415 = vmatpush2.msra.mxu0 0.0
    %416 = vmatprep.subr.mxu0 0.0
    %417 = vmatpush2.msra.mxu0 0.0
    %418 = vmatprep.subr.mxu0 0.0
    %419 = vmatpush2.msra.mxu0 0.0
    %420 = vmatprep.subr.mxu0 0.0
    %421 = vmatpush2.msra.mxu0 0.0
    %422 = vmatprep.subr.mxu0 0.0
    %423 = vmatpush2.msra.mxu0 0.0
    %424 = vmatprep.subr.mxu0 0.0
    %425 = vmatpush2.msra.mxu0 0.0
    %426 = vmatprep.subr.mxu0 0.0
    %427 = vmatpush2.msra.mxu0 0.0
    %428 = vmatprep.subr.mxu0 0.0
    %429 = vmatpush2.msra.mxu0 0.0
    %430 = vmatprep.subr.mxu0 0.0
    %431 = vmatpush2.msra.mxu0 0.0
    %432 = vmatprep.subr.mxu0 0.0
    %433 = vmatpush2.msra.mxu0 0.0
    %434 = vmatprep.subr.mxu0 0.0
    %435 = vmatpush2.msra.mxu0 0.0
    %436 = vmatprep.subr.mxu0 0.0
    %437 = vmatpush2.msra.mxu0 0.0
    %438 = vmatprep.subr.mxu0 0.0
    %439 = vmatpush2.msra.mxu0 0.0
    %440 = vmatprep.subr.mxu0 0.0
    %441 = vmatpush2.msra.mxu0 0.0
    %442 = vmatprep.subr.mxu0 0.0
    %443 = vmatpush2.msra.mxu0 0.0
    %444 = vmatprep.mubr.f32.mxu0 0.0
    %445 = vmatmul.mubr.f32.gmra.mxu0 %v378
    %v446 = vpop.f32.mrf.mxu0
    %v447 = vadd.f32 %v376, %v446
    %v448 = vpop.f32.mrf.mxu0
    %449 = vdwg.mxu0
    %v450 = vtanh.pop %v447
    %451 = vst.msk [vmem:[%s298] sm:$0xff] %vm119, %v450
    %s452 = scalar_lea.vmem [#allocation2], 32
    %v453 = vld [vmem:[%s452] sm:$0xff]
    %v455 = vsel %vm119, %v450, 0
    %457 = vmatprep.subr.mxu0 0.0
    %458 = vmatpush1.msra.mxu0 0.0
    %459 = vmatprep.subr.mxu0 0.0
    %460 = vmatpush1.msra.mxu0 0.0
    %461 = vmatprep.subr.mxu0 0.0
    %462 = vmatpush1.msra.mxu0 0.0
    %463 = vmatprep.subr.mxu0 0.0
    %464 = vmatpush1.msra.mxu0 0.0
    %465 = vmatprep.subr.mxu0 0.0
    %466 = vmatpush1.msra.mxu0 0.0
    %467 = vmatprep.subr.mxu0 0.0
    %468 = vmatpush1.msra.mxu0 0.0
    %469 = vmatprep.subr.mxu0 0.0
    %470 = vmatpush1.msra.mxu0 0.0
    %471 = vmatprep.subr.mxu0 0.0
    %472 = vmatpush1.msra.mxu0 0.0
    %473 = vmatprep.subr.mxu0 0.0
    %474 = vmatpush1.msra.mxu0 %v31
    %475 = vmatprep.subr.mxu0 0.0
    %476 = vmatpush1.msra.mxu0 %v30
    %477 = vmatprep.subr.mxu0 0.0
    %478 = vmatpush1.msra.mxu0 %v29
    %479 = vmatprep.subr.mxu0 0.0
    %480 = vmatpush1.msra.mxu0 %v28
    %481 = vmatprep.subr.mxu0 0.0
    %482 = vmatpush1.msra.mxu0 %v27
    %483 = vmatprep.subr.mxu0 0.0
    %484 = vmatpush1.msra.mxu0 %v26
    %485 = vmatprep.subr.mxu0 0.0
    %486 = vmatpush1.msra.mxu0 %v25
    %487 = vmatprep.subr.mxu0 0.0
    %488 = vmatpush1.msra.mxu0 %v24
    %489 = vmatprep.subr.mxu0 0.0
    %490 = vmatpush2.msra.mxu0 0.0
    %491 = vmatprep.subr.mxu0 0.0
    %492 = vmatpush2.msra.mxu0 0.0
    %493 = vmatprep.subr.mxu0 0.0
    %494 = vmatpush2.msra.mxu0 0.0
    %495 = vmatprep.subr.mxu0 0.0
    %496 = vmatpush2.msra.mxu0 0.0
    %497 = vmatprep.subr.mxu0 0.0
    %498 = vmatpush2.msra.mxu0 0.0
    %499 = vmatprep.subr.mxu0 0.0
    %500 = vmatpush2.msra.mxu0 0.0
    %501 = vmatprep.subr.mxu0 0.0
    %502 = vmatpush2.msra.mxu0 0.0
    %503 = vmatprep.subr.mxu0 0.0
    %504 = vmatpush2.msra.mxu0 0.0
    %505 = vmatprep.subr.mxu0 0.0
    %506 = vmatpush2.msra.mxu0 0.0
    %507 = vmatprep.subr.mxu0 0.0
    %508 = vmatpush2.msra.mxu0 0.0
    %509 = vmatprep.subr.mxu0 0.0
    %510 = vmatpush2.msra.mxu0 0.0
    %511 = vmatprep.subr.mxu0 0.0
    %512 = vmatpush2.msra.mxu0 0.0
    %513 = vmatprep.subr.mxu0 0.0
    %514 = vmatpush2.msra.mxu0 0.0
    %515 = vmatprep.subr.mxu0 0.0
    %516 = vmatpush2.msra.mxu0 0.0
    %517 = vmatprep.subr.mxu0 0.0
    %518 = vmatpush2.msra.mxu0 0.0
    %519 = vmatprep.subr.mxu0 0.0
    %520 = vmatpush2.msra.mxu0 0.0
    %521 = vmatprep.mubr.f32.mxu0 0.0
    %522 = vmatmul.mubr.f32.gmra.mxu0 %v455
    %v523 = vpop.f32.mrf.mxu0
    %v524 = vadd.f32 %v453, %v523
    %v525 = vpop.f32.mrf.mxu0
    %526 = vdwg.mxu0
    %v527 = vtanh.pop %v524
    %528 = vst.msk [vmem:[%s375] sm:$0xff] %vm119, %v527
    %s529 = scalar_lea.vmem [#allocation2], 40
    %v530 = vld [vmem:[%s529] sm:$0xff]
    %v532 = vsel %vm119, %v527, 0
    %534 = vmatprep.subr.mxu0 0.0
    %535 = vmatpush1.msra.mxu0 0.0
    %536 = vmatprep.subr.mxu0 0.0
    %537 = vmatpush1.msra.mxu0 0.0
    %538 = vmatprep.subr.mxu0 0.0
    %539 = vmatpush1.msra.mxu0 0.0
    %540 = vmatprep.subr.mxu0 0.0
    %541 = vmatpush1.msra.mxu0 0.0
    %542 = vmatprep.subr.mxu0 0.0
    %543 = vmatpush1.msra.mxu0 0.0
    %544 = vmatprep.subr.mxu0 0.0
    %545 = vmatpush1.msra.mxu0 0.0
    %546 = vmatprep.subr.mxu0 0.0
    %547 = vmatpush1.msra.mxu0 0.0
    %548 = vmatprep.subr.mxu0 0.0
    %549 = vmatpush1.msra.mxu0 0.0
    %550 = vmatprep.subr.mxu0 0.0
    %551 = vmatpush1.msra.mxu0 %v31
    %552 = vmatprep.subr.mxu0 0.0
    %553 = vmatpush1.msra.mxu0 %v30
    %554 = vmatprep.subr.mxu0 0.0
    %555 = vmatpush1.msra.mxu0 %v29
    %556 = vmatprep.subr.mxu0 0.0
    %557 = vmatpush1.msra.mxu0 %v28
    %558 = vmatprep.subr.mxu0 0.0
    %559 = vmatpush1.msra.mxu0 %v27
    %560 = vmatprep.subr.mxu0 0.0
    %561 = vmatpush1.msra.mxu0 %v26
    %562 = vmatprep.subr.mxu0 0.0
    %563 = vmatpush1.msra.mxu0 %v25
    %564 = vmatprep.subr.mxu0 0.0
    %565 = vmatpush1.msra.mxu0 %v24
    %566 = vmatprep.subr.mxu0 0.0
    %567 = vmatpush2.msra.mxu0 0.0
    %568 = vmatprep.subr.mxu0 0.0
    %569 = vmatpush2.msra.mxu0 0.0
    %570 = vmatprep.subr.mxu0 0.0
    %571 = vmatpush2.msra.mxu0 0.0
    %572 = vmatprep.subr.mxu0 0.0
    %573 = vmatpush2.msra.mxu0 0.0
    %574 = vmatprep.subr.mxu0 0.0
    %575 = vmatpush2.msra.mxu0 0.0
    %576 = vmatprep.subr.mxu0 0.0
    %577 = vmatpush2.msra.mxu0 0.0
    %578 = vmatprep.subr.mxu0 0.0
    %579 = vmatpush2.msra.mxu0 0.0
    %580 = vmatprep.subr.mxu0 0.0
    %581 = vmatpush2.msra.mxu0 0.0
    %582 = vmatprep.subr.mxu0 0.0
    %583 = vmatpush2.msra.mxu0 0.0
    %584 = vmatprep.subr.mxu0 0.0
    %585 = vmatpush2.msra.mxu0 0.0
    %586 = vmatprep.subr.mxu0 0.0
    %587 = vmatpush2.msra.mxu0 0.0
    %588 = vmatprep.subr.mxu0 0.0
    %589 = vmatpush2.msra.mxu0 0.0
    %590 = vmatprep.subr.mxu0 0.0
    %591 = vmatpush2.msra.mxu0 0.0
    %592 = vmatprep.subr.mxu0 0.0
    %593 = vmatpush2.msra.mxu0 0.0
    %594 = vmatprep.subr.mxu0 0.0
    %595 = vmatpush2.msra.mxu0 0.0
    %596 = vmatprep.subr.mxu0 0.0
    %597 = vmatpush2.msra.mxu0 0.0
    %598 = vmatprep.mubr.f32.mxu0 0.0
    %599 = vmatmul.mubr.f32.gmra.mxu0 %v532
    %v600 = vpop.f32.mrf.mxu0
    %v601 = vadd.f32 %v530, %v600
    %v602 = vpop.f32.mrf.mxu0
    %603 = vdwg.mxu0
    %v604 = vtanh.pop %v601
    %605 = vst.msk [vmem:[%s452] sm:$0xff] %vm119, %v604
    %s606 = scalar_lea.vmem [#allocation2], 48
    %v607 = vld [vmem:[%s606] sm:$0xff]
    %v609 = vsel %vm119, %v604, 0
    %611 = vmatprep.subr.mxu0 0.0
    %612 = vmatpush1.msra.mxu0 0.0
    %613 = vmatprep.subr.mxu0 0.0
    %614 = vmatpush1.msra.mxu0 0.0
    %615 = vmatprep.subr.mxu0 0.0
    %616 = vmatpush1.msra.mxu0 0.0
    %617 = vmatprep.subr.mxu0 0.0
    %618 = vmatpush1.msra.mxu0 0.0
    %619 = vmatprep.subr.mxu0 0.0
    %620 = vmatpush1.msra.mxu0 0.0
    %621 = vmatprep.subr.mxu0 0.0
    %622 = vmatpush1.msra.mxu0 0.0
    %623 = vmatprep.subr.mxu0 0.0
    %624 = vmatpush1.msra.mxu0 0.0
    %625 = vmatprep.subr.mxu0 0.0
    %626 = vmatpush1.msra.mxu0 0.0
    %627 = vmatprep.subr.mxu0 0.0
    %628 = vmatpush1.msra.mxu0 %v31
    %629 = vmatprep.subr.mxu0 0.0
    %630 = vmatpush1.msra.mxu0 %v30
    %631 = vmatprep.subr.mxu0 0.0
    %632 = vmatpush1.msra.mxu0 %v29
    %633 = vmatprep.subr.mxu0 0.0
    %634 = vmatpush1.msra.mxu0 %v28
    %635 = vmatprep.subr.mxu0 0.0
    %636 = vmatpush1.msra.mxu0 %v27
    %637 = vmatprep.subr.mxu0 0.0
    %638 = vmatpush1.msra.mxu0 %v26
    %639 = vmatprep.subr.mxu0 0.0
    %640 = vmatpush1.msra.mxu0 %v25
    %641 = vmatprep.subr.mxu0 0.0
    %642 = vmatpush1.msra.mxu0 %v24
    %643 = vmatprep.subr.mxu0 0.0
    %644 = vmatpush2.msra.mxu0 0.0
    %645 = vmatprep.subr.mxu0 0.0
    %646 = vmatpush2.msra.mxu0 0.0
    %647 = vmatprep.subr.mxu0 0.0
    %648 = vmatpush2.msra.mxu0 0.0
    %649 = vmatprep.subr.mxu0 0.0
    %650 = vmatpush2.msra.mxu0 0.0
    %651 = vmatprep.subr.mxu0 0.0
    %652 = vmatpush2.msra.mxu0 0.0
    %653 = vmatprep.subr.mxu0 0.0
    %654 = vmatpush2.msra.mxu0 0.0
    %655 = vmatprep.subr.mxu0 0.0
    %656 = vmatpush2.msra.mxu0 0.0
    %657 = vmatprep.subr.mxu0 0.0
    %658 = vmatpush2.msra.mxu0 0.0
    %659 = vmatprep.subr.mxu0 0.0
    %660 = vmatpush2.msra.mxu0 0.0
    %661 = vmatprep.subr.mxu0 0.0
    %662 = vmatpush2.msra.mxu0 0.0
    %663 = vmatprep.subr.mxu0 0.0
    %664 = vmatpush2.msra.mxu0 0.0
    %665 = vmatprep.subr.mxu0 0.0
    %666 = vmatpush2.msra.mxu0 0.0
    %667 = vmatprep.subr.mxu0 0.0
    %668 = vmatpush2.msra.mxu0 0.0
    %669 = vmatprep.subr.mxu0 0.0
    %670 = vmatpush2.msra.mxu0 0.0
    %671 = vmatprep.subr.mxu0 0.0
    %672 = vmatpush2.msra.mxu0 0.0
    %673 = vmatprep.subr.mxu0 0.0
    %674 = vmatpush2.msra.mxu0 0.0
    %675 = vmatprep.mubr.f32.mxu0 0.0
    %676 = vmatmul.mubr.f32.gmra.mxu0 %v609
    %v677 = vpop.f32.mrf.mxu0
    %v678 = vadd.f32 %v607, %v677
    %v679 = vpop.f32.mrf.mxu0
    %680 = vdwg.mxu0
    %v681 = vtanh.pop %v678
    %682 = vst.msk [vmem:[%s529] sm:$0xff] %vm119, %v681
    %s683 = scalar_lea.vmem [#allocation2], 56
    %v684 = vld [vmem:[%s683] sm:$0xff]
    %v686 = vsel %vm119, %v681, 0
    %688 = vmatprep.subr.mxu0 0.0
    %689 = vmatpush1.msra.mxu0 0.0
    %690 = vmatprep.subr.mxu0 0.0
    %691 = vmatpush1.msra.mxu0 0.0
    %692 = vmatprep.subr.mxu0 0.0
    %693 = vmatpush1.msra.mxu0 0.0
    %694 = vmatprep.subr.mxu0 0.0
    %695 = vmatpush1.msra.mxu0 0.0
    %696 = vmatprep.subr.mxu0 0.0
    %697 = vmatpush1.msra.mxu0 0.0
    %698 = vmatprep.subr.mxu0 0.0
    %699 = vmatpush1.msra.mxu0 0.0
    %700 = vmatprep.subr.mxu0 0.0
    %701 = vmatpush1.msra.mxu0 0.0
    %702 = vmatprep.subr.mxu0 0.0
    %703 = vmatpush1.msra.mxu0 0.0
    %704 = vmatprep.subr.mxu0 0.0
    %705 = vmatpush1.msra.mxu0 %v31
    %706 = vmatprep.subr.mxu0 0.0
    %707 = vmatpush1.msra.mxu0 %v30
    %708 = vmatprep.subr.mxu0 0.0
    %709 = vmatpush1.msra.mxu0 %v29
    %710 = vmatprep.subr.mxu0 0.0
    %711 = vmatpush1.msra.mxu0 %v28
    %712 = vmatprep.subr.mxu0 0.0
    %713 = vmatpush1.msra.mxu0 %v27
    %714 = vmatprep.subr.mxu0 0.0
    %715 = vmatpush1.msra.mxu0 %v26
    %716 = vmatprep.subr.mxu0 0.0
    %717 = vmatpush1.msra.mxu0 %v25
    %718 = vmatprep.subr.mxu0 0.0
    %719 = vmatpush1.msra.mxu0 %v24
    %720 = vmatprep.subr.mxu0 0.0
    %721 = vmatpush2.msra.mxu0 0.0
    %722 = vmatprep.subr.mxu0 0.0
    %723 = vmatpush2.msra.mxu0 0.0
    %724 = vmatprep.subr.mxu0 0.0
    %725 = vmatpush2.msra.mxu0 0.0
    %726 = vmatprep.subr.mxu0 0.0
    %727 = vmatpush2.msra.mxu0 0.0
    %728 = vmatprep.subr.mxu0 0.0
    %729 = vmatpush2.msra.mxu0 0.0
    %730 = vmatprep.subr.mxu0 0.0
    %731 = vmatpush2.msra.mxu0 0.0
    %732 = vmatprep.subr.mxu0 0.0
    %733 = vmatpush2.msra.mxu0 0.0
    %734 = vmatprep.subr.mxu0 0.0
    %735 = vmatpush2.msra.mxu0 0.0
    %736 = vmatprep.subr.mxu0 0.0
    %737 = vmatpush2.msra.mxu0 0.0
    %738 = vmatprep.subr.mxu0 0.0
    %739 = vmatpush2.msra.mxu0 0.0
    %740 = vmatprep.subr.mxu0 0.0
    %741 = vmatpush2.msra.mxu0 0.0
    %742 = vmatprep.subr.mxu0 0.0
    %743 = vmatpush2.msra.mxu0 0.0
    %744 = vmatprep.subr.mxu0 0.0
    %745 = vmatpush2.msra.mxu0 0.0
    %746 = vmatprep.subr.mxu0 0.0
    %747 = vmatpush2.msra.mxu0 0.0
    %748 = vmatprep.subr.mxu0 0.0
    %749 = vmatpush2.msra.mxu0 0.0
    %750 = vmatprep.subr.mxu0 0.0
    %751 = vmatpush2.msra.mxu0 0.0
    %752 = vmatprep.mubr.f32.mxu0 0.0
    %753 = vmatmul.mubr.f32.gmra.mxu0 %v686
    %v754 = vpop.f32.mrf.mxu0
    %v755 = vadd.f32 %v684, %v754
    %v756 = vpop.f32.mrf.mxu0
    %757 = vdwg.mxu0
    %v758 = vtanh.pop %v755
    %759 = vst.msk [vmem:[%s606] sm:$0xff] %vm119, %v758
    %760 = vst.msk [vmem:[#allocation3] sm:$0xff] %vm119, %v758
    %v762 = vsel %vm119, %v758, 0
    %764 = vmatprep.subr.mxu0 0.0
    %765 = vmatpush1.msra.mxu0 0.0
    %766 = vmatprep.subr.mxu0 0.0
    %767 = vmatpush1.msra.mxu0 0.0
    %768 = vmatprep.subr.mxu0 0.0
    %769 = vmatpush1.msra.mxu0 0.0
    %770 = vmatprep.subr.mxu0 0.0
    %771 = vmatpush1.msra.mxu0 0.0
    %772 = vmatprep.subr.mxu0 0.0
    %773 = vmatpush1.msra.mxu0 0.0
    %774 = vmatprep.subr.mxu0 0.0
    %775 = vmatpush1.msra.mxu0 0.0
    %776 = vmatprep.subr.mxu0 0.0
    %777 = vmatpush1.msra.mxu0 0.0
    %778 = vmatprep.subr.mxu0 0.0
    %779 = vmatpush1.msra.mxu0 0.0
    %780 = vmatprep.subr.mxu0 0.0
    %781 = vmatpush1.msra.mxu0 %v31
    %782 = vmatprep.subr.mxu0 0.0
    %783 = vmatpush1.msra.mxu0 %v30
    %784 = vmatprep.subr.mxu0 0.0
    %785 = vmatpush1.msra.mxu0 %v29
    %786 = vmatprep.subr.mxu0 0.0
    %787 = vmatpush1.msra.mxu0 %v28
    %788 = vmatprep.subr.mxu0 0.0
    %789 = vmatpush1.msra.mxu0 %v27
    %790 = vmatprep.subr.mxu0 0.0
    %791 = vmatpush1.msra.mxu0 %v26
    %792 = vmatprep.subr.mxu0 0.0
    %793 = vmatpush1.msra.mxu0 %v25
    %794 = vmatprep.subr.mxu0 0.0
    %795 = vmatpush1.msra.mxu0 %v24
    %796 = vmatprep.subr.mxu0 0.0
    %797 = vmatpush2.msra.mxu0 0.0
    %798 = vmatprep.subr.mxu0 0.0
    %799 = vmatpush2.msra.mxu0 0.0
    %800 = vmatprep.subr.mxu0 0.0
    %801 = vmatpush2.msra.mxu0 0.0
    %802 = vmatprep.subr.mxu0 0.0
    %803 = vmatpush2.msra.mxu0 0.0
    %804 = vmatprep.subr.mxu0 0.0
    %805 = vmatpush2.msra.mxu0 0.0
    %806 = vmatprep.subr.mxu0 0.0
    %807 = vmatpush2.msra.mxu0 0.0
    %808 = vmatprep.subr.mxu0 0.0
    %809 = vmatpush2.msra.mxu0 0.0
    %810 = vmatprep.subr.mxu0 0.0
    %811 = vmatpush2.msra.mxu0 0.0
    %812 = vmatprep.subr.mxu0 0.0
    %813 = vmatpush2.msra.mxu0 0.0
    %814 = vmatprep.subr.mxu0 0.0
    %815 = vmatpush2.msra.mxu0 0.0
    %816 = vmatprep.subr.mxu0 0.0
    %817 = vmatpush2.msra.mxu0 0.0
    %818 = vmatprep.subr.mxu0 0.0
    %819 = vmatpush2.msra.mxu0 0.0
    %820 = vmatprep.subr.mxu0 0.0
    %821 = vmatpush2.msra.mxu0 0.0
    %822 = vmatprep.subr.mxu0 0.0
    %823 = vmatpush2.msra.mxu0 0.0
    %824 = vmatprep.subr.mxu0 0.0
    %825 = vmatpush2.msra.mxu0 0.0
    %826 = vmatprep.subr.mxu0 0.0
    %827 = vmatpush2.msra.mxu0 0.0
    %828 = vmatprep.mubr.f32.mxu0 0.0
    %829 = vmatmul.mubr.f32.gmra.mxu0 %v762
    %v830 = vpop.f32.mrf.mxu0
    %v831 = vadd.f32 %v109, %v830
    %v832 = vpop.f32.mrf.mxu0
    %833 = vdwg.mxu0
    %v834 = vtanh.pop %v831
    %835 = vst.msk [vmem:[%s683] sm:$0xff] %vm119, %v834
    %v836 = vld [vmem:[#allocation2] sm:$0xff]
    %v837 = vld [vmem:[#allocation2 + $0x8] sm:$0xff]
    %v838 = vld [vmem:[#allocation2 + $0x10] sm:$0xff]
    %v839 = vld [vmem:[#allocation2 + $0x18] sm:$0xff]
    %v840 = vld [vmem:[#allocation2 + $0x20] sm:$0xff]
    %v841 = vld [vmem:[#allocation2 + $0x28] sm:$0xff]
    %v842 = vld [vmem:[#allocation2 + $0x30] sm:$0xff]
    %v843 = vld [vmem:[#allocation2 + $0x38] sm:$0xff]
    %v844 = vld [vmem:[%s4] sm:$0xff]
    %v845 = vld [vmem:[%s4 + $0x8] sm:$0xff]
    %v846 = vld [vmem:[%s4 + $0x10] sm:$0xff]
    %v847 = vld [vmem:[%s4 + $0x18] sm:$0xff]
    %v848 = vld [vmem:[%s4 + $0x20] sm:$0xff]
    %v849 = vld [vmem:[%s4 + $0x28] sm:$0xff]
    %v850 = vld [vmem:[%s4 + $0x30] sm:$0xff]
    %v851 = vld [vmem:[%s4 + $0x38] sm:$0xff]
    %v852 = vld [vmem:[%s5] sm:$0x1]
    %v854 = vlaneseq
    %v855 = vshrl.u32 %v854, 7
    %v856 = vsub.s32 0, %v855
    %v857 = vrot.slane %v852, %v856
    %v860 = vsel %vm119, %v836, 0
    %v863 = vsel %vm119, %v837, 0
    %v866 = vsel %vm119, %v838, 0
    %v869 = vsel %vm119, %v839, 0
    %v872 = vsel %vm119, %v840, 0
    %v875 = vsel %vm119, %v841, 0
    %v878 = vsel %vm119, %v842, 0
    %v881 = vsel %vm119, %v843, 0
    %883 = vmatprep.subr.mxu0 0.0
    %884 = vmatpush1.msra.mxu0 0.0
    %885 = vmatprep.subr.mxu0 0.0
    %886 = vmatpush1.msra.mxu0 0.0
    %887 = vmatprep.subr.mxu0 0.0
    %888 = vmatpush1.msra.mxu0 0.0
    %889 = vmatprep.subr.mxu0 0.0
    %890 = vmatpush1.msra.mxu0 0.0
    %891 = vmatprep.subr.mxu0 0.0
    %892 = vmatpush1.msra.mxu0 0.0
    %893 = vmatprep.subr.mxu0 0.0
    %894 = vmatpush1.msra.mxu0 0.0
    %895 = vmatprep.subr.mxu0 0.0
    %896 = vmatpush1.msra.mxu0 0.0
    %897 = vmatprep.subr.mxu0 0.0
    %898 = vmatpush1.msra.mxu0 0.0
    %899 = vmatprep.subr.mxu0 0.0
    %900 = vmatpush1.msra.mxu0 %v851
    %901 = vmatprep.subr.mxu0 0.0
    %902 = vmatpush1.msra.mxu0 %v850
    %903 = vmatprep.subr.mxu0 0.0
    %904 = vmatpush1.msra.mxu0 %v849
    %905 = vmatprep.subr.mxu0 0.0
    %906 = vmatpush1.msra.mxu0 %v848
    %907 = vmatprep.subr.mxu0 0.0
    %908 = vmatpush1.msra.mxu0 %v847
    %909 = vmatprep.subr.mxu0 0.0
    %910 = vmatpush1.msra.mxu0 %v846
    %911 = vmatprep.subr.mxu0 0.0
    %912 = vmatpush1.msra.mxu0 %v845
    %913 = vmatprep.subr.mxu0 0.0
    %914 = vmatpush1.msra.mxu0 %v844
    %915 = vmatprep.subr.mxu0 0.0
    %916 = vmatpush2.msra.mxu0 0.0
    %917 = vmatprep.subr.mxu0 0.0
    %918 = vmatpush2.msra.mxu0 0.0
    %919 = vmatprep.subr.mxu0 0.0
    %920 = vmatpush2.msra.mxu0 0.0
    %921 = vmatprep.subr.mxu0 0.0
    %922 = vmatpush2.msra.mxu0 0.0
    %923 = vmatprep.subr.mxu0 0.0
    %924 = vmatpush2.msra.mxu0 0.0
    %925 = vmatprep.subr.mxu0 0.0
    %926 = vmatpush2.msra.mxu0 0.0
    %927 = vmatprep.subr.mxu0 0.0
    %928 = vmatpush2.msra.mxu0 0.0
    %929 = vmatprep.subr.mxu0 0.0
    %930 = vmatpush2.msra.mxu0 0.0
    %931 = vmatprep.subr.mxu0 0.0
    %932 = vmatpush2.msra.mxu0 0.0
    %933 = vmatprep.subr.mxu0 0.0
    %934 = vmatpush2.msra.mxu0 0.0
    %935 = vmatprep.subr.mxu0 0.0
    %936 = vmatpush2.msra.mxu0 0.0
    %937 = vmatprep.subr.mxu0 0.0
    %938 = vmatpush2.msra.mxu0 0.0
    %939 = vmatprep.subr.mxu0 0.0
    %940 = vmatpush2.msra.mxu0 0.0
    %941 = vmatprep.subr.mxu0 0.0
    %942 = vmatpush2.msra.mxu0 0.0
    %943 = vmatprep.subr.mxu0 0.0
    %944 = vmatpush2.msra.mxu0 0.0
    %945 = vmatprep.subr.mxu0 0.0
    %946 = vmatpush2.msra.mxu0 0.0
    %947 = vmatprep.mubr.f32.mxu0 0.0
    %948 = vmatmul.mubr.f32.gmra.mxu0 %v860
    %v949 = vpop.f32.mrf.mxu0
    %v950 = vadd.f32 %v857, %v949
    %v951 = vpop.f32.mrf.mxu0
    %952 = vmatprep.mubr.f32.mxu0 0.0
    %953 = vmatmul.mubr.f32.gmra.mxu0 %v863
    %v954 = vpop.f32.mrf.mxu0
    %v955 = vadd.f32 %v857, %v954
    %v956 = vpop.f32.mrf.mxu0
    %957 = vmatprep.mubr.f32.mxu0 0.0
    %958 = vmatmul.mubr.f32.gmra.mxu0 %v866
    %v959 = vpop.f32.mrf.mxu0
    %v960 = vadd.f32 %v857, %v959
    %v961 = vpop.f32.mrf.mxu0
    %962 = vmatprep.mubr.f32.mxu0 0.0
    %963 = vmatmul.mubr.f32.gmra.mxu0 %v869
    %v964 = vpop.f32.mrf.mxu0
    %v965 = vadd.f32 %v857, %v964
    %v966 = vpop.f32.mrf.mxu0
    %967 = vmatprep.mubr.f32.mxu0 0.0
    %968 = vmatmul.mubr.f32.gmra.mxu0 %v872
    %v969 = vpop.f32.mrf.mxu0
    %v970 = vadd.f32 %v857, %v969
    %v971 = vpop.f32.mrf.mxu0
    %972 = vmatprep.mubr.f32.mxu0 0.0
    %973 = vmatmul.mubr.f32.gmra.mxu0 %v875
    %v974 = vpop.f32.mrf.mxu0
    %v975 = vadd.f32 %v857, %v974
    %v976 = vpop.f32.mrf.mxu0
    %977 = vmatprep.mubr.f32.mxu0 0.0
    %978 = vmatmul.mubr.f32.gmra.mxu0 %v878
    %v979 = vpop.f32.mrf.mxu0
    %v980 = vadd.f32 %v857, %v979
    %v981 = vpop.f32.mrf.mxu0
    %982 = vmatprep.mubr.f32.mxu0 0.0
    %983 = vmatmul.mubr.f32.gmra.mxu0 %v881
    %v984 = vpop.f32.mrf.mxu0
    %v985 = vadd.f32 %v857, %v984
    %v986 = vpop.f32.mrf.mxu0
    %987 = vdwg.mxu0
    %vm988 = vcmask 80896
    %989 = vst.msk [vmem:[#allocation4] sm:$0xff] %vm988, %v950
    %990 = vst.msk [vmem:[#allocation4 + $0x8] sm:$0xff] %vm988, %v955
    %991 = vst.msk [vmem:[#allocation4 + $0x10] sm:$0xff] %vm988, %v960
    %992 = vst.msk [vmem:[#allocation4 + $0x18] sm:$0xff] %vm988, %v965
    %993 = vst.msk [vmem:[#allocation4 + $0x20] sm:$0xff] %vm988, %v970
    %994 = vst.msk [vmem:[#allocation4 + $0x28] sm:$0xff] %vm988, %v975
    %995 = vst.msk [vmem:[#allocation4 + $0x30] sm:$0xff] %vm988, %v980
    %996 = vst.msk [vmem:[#allocation4 + $0x38] sm:$0xff] %vm988, %v985
    // Predicated region
    $region34: #{tpu_custom_call.1} parent=1 // pred_check
      _
    $region35: #{tpu_custom_call.1} parent=1 // pred_check_branch
      %998 = sbr.rel (0) target = $region37
    $region36: #{tpu_custom_call.1} parent=1 // pred_region
      %s1000 = ssub.s32 1024, 1024
      %1001 = vsyncadd [#allocation5], %s1000
      %s1002 = sshll.u32 [#allocation4], 4
      %s1003 = int_to_ptr.vmem [resolvable:$true] %s1002
      %1008 = dma.vmem_to_hbm [thread:$0]  %s1003, 1024, %s6, [#allocation5], 128, 128, 8
    $region37: #{tpu_custom_call.1} parent=1 // pred_fallthru
      _
    // Predicated region
    $region38: #{tpu_custom_call.1} parent=1 // pred_check
      _
    $region39: #{tpu_custom_call.1} parent=1 // pred_check_branch
      %1010 = sbr.rel (0) target = $region41
    $region40: #{tpu_custom_call.1} parent=1 // pred_region
      %1011 = dma.done [#allocation5], 1024
    $region41: #{tpu_custom_call.1} parent=1 // pred_fallthru
      _
    %1012 = vsyncpa [#allocation5], 1

</llo_original>
